<compile_context>
chip_gen: v7x
topology: tpu7x:2x2x1
jax: 0.10.0
libtpu: 0.0.40
codegen_flags: <defaults>
</compile_context>

<pallas_src>
import jax
import jax.numpy as jnp
from jax.experimental import pallas as pl
from jax.experimental.pallas import tpu as pltpu

_LANE = 128
_UNROLL_THRESHOLD = 8  # fully unroll hidden layers up to this many; fori_loop beyond


def _round_up(n: int, m: int) -> int:
    return ((n + m - 1) // m) * m


def _pad_to(a, target_shape):
    pads = [(0, t - s) for s, t in zip(a.shape, target_shape)]
    if any(p for _, p in pads):
        a = jnp.pad(a, pads)
    return a


def _make_kernel(nlayers: int, first_resid: bool, last_resid: bool,
                 negative_slope: float, compute_dtype):
    """Build the fused MLP kernel with static layer count / residual flags."""

    def act(h):
        if negative_slope == 0.0:  # torch.nn.ReLU
            return jnp.maximum(h, 0.0)
        return jnp.where(h >= 0.0, h, negative_slope * h)  # torch.nn.LeakyReLU

    def kernel(x_ref, w_in_ref, b_in_ref, w_hid_ref, b_hid_ref,
               w_out_ref, b_out_ref, o_ref):
        x = x_ref[...]  # (tb, in_p) in compute_dtype (bf16 by default)

        # ----- first layer: Linear(in, hid) (+ identity skip iff in_dim == hidden) ---
        h = jnp.dot(x, w_in_ref[...], preferred_element_type=jnp.float32)
        h = h + b_in_ref[...]            # bias kept in f32
        if first_resid:
            h = h + x.astype(jnp.float32)
        h = act(h)

        # ----- nlayers hidden ResidLinear(hid, hid) + activation ---------------------
        def layer_body(layer, h):
            z = jnp.dot(h.astype(compute_dtype), w_hid_ref[layer],
                        preferred_element_type=jnp.float32)
            z = z + b_hid_ref[layer]     # (1, hid_p) broadcasts over batch tile
            return act(z + h)            # residual before activation (matches PyTorch)

        if nlayers <= _UNROLL_THRESHOLD:
            for layer in range(nlayers):
                h = layer_body(layer, h)
        else:
            h = jax.lax.fori_loop(0, nlayers, layer_body, h)

        # ----- last layer: Linear(hid, out) (+ identity skip iff out_dim == hidden) --
        out = jnp.dot(h.astype(compute_dtype), w_out_ref[...],
                      preferred_element_type=jnp.float32)
        out = out + b_out_ref[...]
        if last_resid:
            out = out + h

        o_ref[...] = out.astype(o_ref.dtype)

    return kernel


def resid_linear_mlp(x, params, *, nlayers: int, negative_slope: float = 0.0,
                     tb: int | None = None, compute_dtype=jnp.bfloat16):
    """ResidLinearMLP forward pass as a single fused Pallas kernel.

    x: (B, in_dim) float32
    params: dict with w_in (in,hid), b_in (1,hid), w_hid (nlayers,hid,hid),
            b_hid (nlayers,1,hid), w_out (hid,out), b_out (1,out)
            -- weights already transposed to (in, out) layout, all float32.
    """
    B, in_dim = x.shape
    hidden_dim = params["w_in"].shape[1]
    out_dim = params["w_out"].shape[1]

    first_resid = (in_dim == hidden_dim)
    last_resid = (out_dim == hidden_dim)

    # ---- lane-dense padding of feature dims (multiples of 128) ---------------------
    in_p = _round_up(in_dim, _LANE)
    hid_p = _round_up(hidden_dim, _LANE)
    out_p = _round_up(out_dim, _LANE)

    # ---- batch tile: fill the MXU (>=128 rows) and amortize per-step overhead ------
    if tb is None:
        tb = 128 if B <= 128 else 256
    B_p = _round_up(B, tb)

    # ---- pad + cast params/inputs (zeros in padded lanes propagate as zeros) -------
    x_p = _pad_to(x, (B_p, in_p)).astype(compute_dtype)
    w_in = _pad_to(params["w_in"], (in_p, hid_p)).astype(compute_dtype)
    b_in = _pad_to(params["b_in"], (1, hid_p)).astype(jnp.float32)
    nl_eff = max(nlayers, 1)
    if nlayers > 0:
        w_hid = _pad_to(params["w_hid"], (nlayers, hid_p, hid_p)).astype(compute_dtype)
        b_hid = _pad_to(params["b_hid"], (nlayers, 1, hid_p)).astype(jnp.float32)
    else:
        w_hid = jnp.zeros((1, hid_p, hid_p), compute_dtype)
        b_hid = jnp.zeros((1, 1, hid_p), jnp.float32)
    w_out = _pad_to(params["w_out"], (hid_p, out_p)).astype(compute_dtype)
    b_out = _pad_to(params["b_out"], (1, out_p)).astype(jnp.float32)

    # ---- VMEM budget: double-buffered inputs/outputs + f32 working set -------------
    cbytes = jnp.dtype(compute_dtype).itemsize
    w_bytes = cbytes * (in_p * hid_p + nl_eff * hid_p * hid_p + hid_p * out_p)
    b_bytes = 4 * (hid_p + nl_eff * hid_p + out_p)
    io_bytes = cbytes * tb * in_p + x.dtype.itemsize * tb * out_p
    work_bytes = 4 * 4 * tb * hid_p  # f32 h + a few temporaries
    vmem_limit = int(2 * (w_bytes + b_bytes + io_bytes) + work_bytes + (4 << 20))
    vmem_limit = min(max(vmem_limit, 32 << 20), 96 << 20)
    # TODO(synk): on v7x (64 MiB VMEM), if 2*w_bytes exceeds ~half the budget, stream
    # w_hid one (hid_p, hid_p) slab at a time via a second grid axis instead of
    # keeping the whole stack resident.

    flops = 2 * B_p * (in_p * hid_p + nlayers * hid_p * hid_p + hid_p * out_p)
    bytes_accessed = (w_bytes + b_bytes + cbytes * B_p * in_p
                      + x.dtype.itemsize * B_p * out_p)

    kernel = _make_kernel(nlayers, first_resid, last_resid, negative_slope,
                          compute_dtype)

    grid = (B_p // tb,)
    out_padded = pl.pallas_call(
        kernel,
        out_shape=jax.ShapeDtypeStruct((B_p, out_p), x.dtype),
        grid_spec=pltpu.PrefetchScalarGridSpec(
            num_scalar_prefetch=0,
            grid=grid,
            in_specs=[
                pl.BlockSpec((tb, in_p), lambda i: (i, 0)),                    # x tile
                pl.BlockSpec((in_p, hid_p), lambda i: (0, 0)),                 # w_in
                pl.BlockSpec((1, hid_p), lambda i: (0, 0)),                    # b_in
                pl.BlockSpec((nl_eff, hid_p, hid_p), lambda i: (0, 0, 0)),     # w_hid
                pl.BlockSpec((nl_eff, 1, hid_p), lambda i: (0, 0, 0)),         # b_hid
                pl.BlockSpec((hid_p, out_p), lambda i: (0, 0)),                # w_out
                pl.BlockSpec((1, out_p), lambda i: (0, 0)),                    # b_out
            ],
            out_specs=pl.BlockSpec((tb, out_p), lambda i: (i, 0)),
        ),
        compiler_params=pltpu.CompilerParams(
            dimension_semantics=("parallel",),
            vmem_limit_bytes=vmem_limit,
        ),
        cost_estimate=pl.CostEstimate(
            flops=flops, transcendentals=0, bytes_accessed=bytes_accessed),
    )(x_p, w_in, b_in, w_hid, b_hid, w_out, b_out)

    return out_padded[:B, :out_dim]


def init_params(key, in_dim, nlayers, hidden_dim, out_dim):
    """Deterministic synthetic parameters (nn.Linear layout: weight (out,in), bias (out,))."""
    keys = jax.random.split(key, 2 * (nlayers + 2))

    def linear(kw, kb, nin, nout):
        bound = 1.0 / jnp.sqrt(jnp.asarray(nin, jnp.float32))
        w = jax.random.uniform(kw, (nout, nin), jnp.float32, -bound, bound)
        b = jax.random.uniform(kb, (nout,), jnp.float32, -bound, bound)
        return w, b

    w_in, b_in = linear(keys[0], keys[1], in_dim, hidden_dim)
    w_hid, b_hid = [], []
    for layer in range(nlayers):
        w, b = linear(keys[2 + 2 * layer], keys[3 + 2 * layer], hidden_dim, hidden_dim)
        w_hid.append(w)
        b_hid.append(b)
    w_out, b_out = linear(keys[-2], keys[-1], hidden_dim, out_dim)

    # Transpose weights to (in, out) for the kernel; biases as (1, out) rows.
    return {
        "w_in": w_in.T,                                       # (in_dim, hidden)
        "b_in": b_in[None, :],                                # (1, hidden)
        "w_hid": jnp.stack([w.T for w in w_hid], 0)           # (nlayers, hidden, hidden)
                 if nlayers > 0 else jnp.zeros((0, hidden_dim, hidden_dim), jnp.float32),
        "b_hid": jnp.stack([b[None, :] for b in b_hid], 0)    # (nlayers, 1, hidden)
                 if nlayers > 0 else jnp.zeros((0, 1, hidden_dim), jnp.float32),
        "w_out": w_out.T,                                     # (hidden, out_dim)
        "b_out": b_out[None, :],                              # (1, out_dim)
    }


def reference_forward(x, params, *, nlayers, in_dim, hidden_dim, out_dim,
                      negative_slope=0.0):
    """Pure-JAX f32 reference mirroring the PyTorch nn.Sequential semantics."""
    def act(h):
        if negative_slope == 0.0:
            return jnp.maximum(h, 0.0)
        return jnp.where(h >= 0.0, h, negative_slope * h)

    h = x @ params["w_in"] + params["b_in"]
    if in_dim == hidden_dim:
        h = h + x
    h = act(h)
    for layer in range(nlayers):
        h = act(h @ params["w_hid"][layer] + params["b_hid"][layer] + h)
    out = h @ params["w_out"] + params["b_out"]
    if out_dim == hidden_dim:
        out = out + h
    return out


if __name__ == "__main__":
    # Small config exercising: plain Linear first layer (in_dim != hidden),
    # two hidden ResidLinear layers, ResidLinear last layer (out_dim == hidden).
    B, in_dim, nlayers, hidden_dim, out_dim = 16, 16, 2, 32, 32
    negative_slope = 0.0  # torch.nn.ReLU

    key = jax.random.PRNGKey(0)
    kx, kp = jax.random.split(key)
    x = jax.random.normal(kx, (B, in_dim), jnp.float32)
    params = init_params(kp, in_dim, nlayers, hidden_dim, out_dim)

    ref = reference_forward(x, params, nlayers=nlayers, in_dim=in_dim,
                            hidden_dim=hidden_dim, out_dim=out_dim,
                            negative_slope=negative_slope)

    # 1) f32 compute path: exact semantics check against the pure-JAX reference.
    out_f32 = jax.block_until_ready(
        resid_linear_mlp(x, params, nlayers=nlayers,
                         negative_slope=negative_slope,
                         compute_dtype=jnp.float32))
    assert out_f32.shape == (B, out_dim)
    assert jnp.allclose(out_f32, ref, atol=1e-5, rtol=1e-5), \
        "f32 Pallas kernel mismatch vs reference"

    # 2) Default bf16-operand / f32-accumulate path (MXU-rate on v6e/v7x).
    out_bf16 = jax.block_until_ready(
        resid_linear_mlp(x, params, nlayers=nlayers,
                         negative_slope=negative_slope))
    assert out_bf16.shape == (B, out_dim)
    assert jnp.allclose(out_bf16, ref, atol=3e-2, rtol=3e-2), \
        "bf16 Pallas kernel mismatch vs reference (beyond bf16 tolerance)"

    print("KERNEL_OK")
</pallas_src>

<mosaic_0001>
module attributes {stable_mosaic.version = 11 : i64} {
  func.func @kernel(%arg0: i32, %arg1: memref<128x128xf32, #tpu.memory_space<vmem>>, %arg2: memref<128x128xf32, #tpu.memory_space<vmem>>, %arg3: memref<1x128xf32, #tpu.memory_space<vmem>>, %arg4: memref<2x128x128xf32, #tpu.memory_space<vmem>>, %arg5: memref<2x1x128xf32, #tpu.memory_space<vmem>>, %arg6: memref<128x128xf32, #tpu.memory_space<vmem>>, %arg7: memref<1x128xf32, #tpu.memory_space<vmem>>, %arg8: memref<128x128xf32, #tpu.memory_space<vmem>>) attributes {dimension_semantics = [#tpu.dimension_semantics<parallel>], iteration_bounds = array<i64: 1>, scalar_prefetch = 0 : i64, scratch_operands = 0 : i64, tpu.core_type = #tpu.core_type<tc>, window_params = [{transform_indices = @transform_0, window_bounds = array<i64: 128, 128>}, {pipeline_mode = #tpu.pipeline_mode<synchronous>, transform_indices = @transform_1, window_bounds = array<i64: 128, 128>}, {pipeline_mode = #tpu.pipeline_mode<synchronous>, transform_indices = @transform_2, window_bounds = array<i64: 1, 128>}, {pipeline_mode = #tpu.pipeline_mode<synchronous>, transform_indices = @transform_3, window_bounds = array<i64: 2, 128, 128>}, {pipeline_mode = #tpu.pipeline_mode<synchronous>, transform_indices = @transform_4, window_bounds = array<i64: 2, 1, 128>}, {pipeline_mode = #tpu.pipeline_mode<synchronous>, transform_indices = @transform_5, window_bounds = array<i64: 128, 128>}, {pipeline_mode = #tpu.pipeline_mode<synchronous>, transform_indices = @transform_6, window_bounds = array<i64: 1, 128>}, {transform_indices = @transform_7, window_bounds = array<i64: 128, 128>}]} {
    %c0 = arith.constant 0 : index
    %c0_0 = arith.constant 0 : index
    %0 = vector.load %arg1[%c0, %c0_0] : memref<128x128xf32, #tpu.memory_space<vmem>>, vector<128x128xf32>
    %c0_1 = arith.constant 0 : index
    %c0_2 = arith.constant 0 : index
    %1 = vector.load %arg2[%c0_1, %c0_2] : memref<128x128xf32, #tpu.memory_space<vmem>>, vector<128x128xf32>
    %cst = arith.constant dense<0.000000e+00> : vector<128x128xf32>
    %2 = tpu.matmul %0, %1, %cst {dimension_numbers = #tpu.dot_dimension_numbers<[1], [0], [0], [1], [0, 0, 1, 1], [], []>} : vector<128x128xf32>, vector<128x128xf32>, vector<128x128xf32> -> vector<128x128xf32>
    %c0_3 = arith.constant 0 : index
    %c0_4 = arith.constant 0 : index
    %3 = vector.load %arg3[%c0_3, %c0_4] : memref<1x128xf32, #tpu.memory_space<vmem>>, vector<1x128xf32>
    %4 = vector.broadcast %3 : vector<1x128xf32> to vector<128x128xf32>
    %5 = arith.addf %2, %4 : vector<128x128xf32>
    %cst_5 = arith.constant 0.000000e+00 : f32
    %6 = vector.broadcast %cst_5 : f32 to vector<128x128xf32>
    %7 = arith.maximumf %5, %6 : vector<128x128xf32>
    %c0_6 = arith.constant 0 : index
    %c0_7 = arith.constant 0 : index
    %c0_8 = arith.constant 0 : index
    %8 = vector.load %arg4[%c0_6, %c0_7, %c0_8] : memref<2x128x128xf32, #tpu.memory_space<vmem>>, vector<1x128x128xf32>
    %9 = vector.shape_cast %8 : vector<1x128x128xf32> to vector<128x128xf32>
    %cst_9 = arith.constant dense<0.000000e+00> : vector<128x128xf32>
    %10 = tpu.matmul %7, %9, %cst_9 {dimension_numbers = #tpu.dot_dimension_numbers<[1], [0], [0], [1], [0, 0, 1, 1], [], []>} : vector<128x128xf32>, vector<128x128xf32>, vector<128x128xf32> -> vector<128x128xf32>
    %c0_10 = arith.constant 0 : index
    %c0_11 = arith.constant 0 : index
    %c0_12 = arith.constant 0 : index
    %11 = vector.load %arg5[%c0_10, %c0_11, %c0_12] : memref<2x1x128xf32, #tpu.memory_space<vmem>>, vector<1x1x128xf32>
    %12 = vector.shape_cast %11 : vector<1x1x128xf32> to vector<1x128xf32>
    %13 = vector.broadcast %12 : vector<1x128xf32> to vector<128x128xf32>
    %14 = arith.addf %10, %13 : vector<128x128xf32>
    %15 = arith.addf %14, %7 : vector<128x128xf32>
    %cst_13 = arith.constant 0.000000e+00 : f32
    %16 = vector.broadcast %cst_13 : f32 to vector<128x128xf32>
    %17 = arith.maximumf %15, %16 : vector<128x128xf32>
    %c1 = arith.constant 1 : index
    %c0_14 = arith.constant 0 : index
    %c0_15 = arith.constant 0 : index
    %18 = vector.load %arg4[%c1, %c0_14, %c0_15] : memref<2x128x128xf32, #tpu.memory_space<vmem>>, vector<1x128x128xf32>
    %19 = vector.shape_cast %18 : vector<1x128x128xf32> to vector<128x128xf32>
    %cst_16 = arith.constant dense<0.000000e+00> : vector<128x128xf32>
    %20 = tpu.matmul %17, %19, %cst_16 {dimension_numbers = #tpu.dot_dimension_numbers<[1], [0], [0], [1], [0, 0, 1, 1], [], []>} : vector<128x128xf32>, vector<128x128xf32>, vector<128x128xf32> -> vector<128x128xf32>
    %c1_17 = arith.constant 1 : index
    %c0_18 = arith.constant 0 : index
    %c0_19 = arith.constant 0 : index
    %21 = vector.load %arg5[%c1_17, %c0_18, %c0_19] : memref<2x1x128xf32, #tpu.memory_space<vmem>>, vector<1x1x128xf32>
    %22 = vector.shape_cast %21 : vector<1x1x128xf32> to vector<1x128xf32>
    %23 = vector.broadcast %22 : vector<1x128xf32> to vector<128x128xf32>
    %24 = arith.addf %20, %23 : vector<128x128xf32>
    %25 = arith.addf %24, %17 : vector<128x128xf32>
    %cst_20 = arith.constant 0.000000e+00 : f32
    %26 = vector.broadcast %cst_20 : f32 to vector<128x128xf32>
    %27 = arith.maximumf %25, %26 : vector<128x128xf32>
    %c0_21 = arith.constant 0 : index
    %c0_22 = arith.constant 0 : index
    %28 = vector.load %arg6[%c0_21, %c0_22] : memref<128x128xf32, #tpu.memory_space<vmem>>, vector<128x128xf32>
    %cst_23 = arith.constant dense<0.000000e+00> : vector<128x128xf32>
    %29 = tpu.matmul %27, %28, %cst_23 {dimension_numbers = #tpu.dot_dimension_numbers<[1], [0], [0], [1], [0, 0, 1, 1], [], []>} : vector<128x128xf32>, vector<128x128xf32>, vector<128x128xf32> -> vector<128x128xf32>
    %c0_24 = arith.constant 0 : index
    %c0_25 = arith.constant 0 : index
    %30 = vector.load %arg7[%c0_24, %c0_25] : memref<1x128xf32, #tpu.memory_space<vmem>>, vector<1x128xf32>
    %31 = vector.broadcast %30 : vector<1x128xf32> to vector<128x128xf32>
    %32 = arith.addf %29, %31 : vector<128x128xf32>
    %33 = arith.addf %32, %27 : vector<128x128xf32>
    %c0_26 = arith.constant 0 : index
    %c0_27 = arith.constant 0 : index
    %34 = vector.load %arg8[%c0_26, %c0_27] : memref<128x128xf32, #tpu.memory_space<vmem>>, vector<128x128xf32>
    tpu.vector_store %arg8[%c0_26, %c0_27], %33 {strides = array<i32>} : memref<128x128xf32, #tpu.memory_space<vmem>>, vector<128x128xf32>,
    return
  }
  func.func @transform_0(%arg0: i32) -> (i32, i32) {
    %c0_i32 = arith.constant 0 : i32
    %c0_i32_0 = arith.constant 0 : i32
    return %arg0, %c0_i32 : i32, i32
  }
  func.func @transform_1(%arg0: i32) -> (i32, i32) {
    %c0_i32 = arith.constant 0 : i32
    %c0_i32_0 = arith.constant 0 : i32
    %c0_i32_1 = arith.constant 0 : i32
    return %c0_i32, %c0_i32_0 : i32, i32
  }
  func.func @transform_2(%arg0: i32) -> (i32, i32) {
    %c0_i32 = arith.constant 0 : i32
    %c0_i32_0 = arith.constant 0 : i32
    %c0_i32_1 = arith.constant 0 : i32
    return %c0_i32, %c0_i32_0 : i32, i32
  }
  func.func @transform_3(%arg0: i32) -> (i32, i32, i32) {
    %c0_i32 = arith.constant 0 : i32
    %c0_i32_0 = arith.constant 0 : i32
    %c0_i32_1 = arith.constant 0 : i32
    %c0_i32_2 = arith.constant 0 : i32
    return %c0_i32, %c0_i32_0, %c0_i32_1 : i32, i32, i32
  }
  func.func @transform_4(%arg0: i32) -> (i32, i32, i32) {
    %c0_i32 = arith.constant 0 : i32
    %c0_i32_0 = arith.constant 0 : i32
    %c0_i32_1 = arith.constant 0 : i32
    %c0_i32_2 = arith.constant 0 : i32
    return %c0_i32, %c0_i32_0, %c0_i32_1 : i32, i32, i32
  }
  func.func @transform_5(%arg0: i32) -> (i32, i32) {
    %c0_i32 = arith.constant 0 : i32
    %c0_i32_0 = arith.constant 0 : i32
    %c0_i32_1 = arith.constant 0 : i32
    return %c0_i32, %c0_i32_0 : i32, i32
  }
  func.func @transform_6(%arg0: i32) -> (i32, i32) {
    %c0_i32 = arith.constant 0 : i32
    %c0_i32_0 = arith.constant 0 : i32
    %c0_i32_1 = arith.constant 0 : i32
    return %c0_i32, %c0_i32_0 : i32, i32
  }
  func.func @transform_7(%arg0: i32) -> (i32, i32) {
    %c0_i32 = arith.constant 0 : i32
    %c0_i32_0 = arith.constant 0 : i32
    return %arg0, %c0_i32 : i32, i32
  }
}

</mosaic_0001>

<llo_original>
// kernel: tpu_custom_call.1
$region0: #{tpu_custom_call.1}
  #allocation0 [shape = 'u32[]', space=smem, size = 0x4, offset = 0x4, fixed_abs, tag = 'smem constant byte address 0x4 - core index']
  #allocation1 [shape = 'u32[144,128]{1,0:T(1,128)}', space=vmem, size = 0x12000, scoped, tag = 'internal scratch']
  %s0 = inlined_call_operand.hbm [shape: f32[128,128], index: 0, kind: input, shape index: {}]
  %s1 = inlined_call_operand.hbm [shape: f32[128,128], index: 1, kind: input, shape index: {}]
  %s2 = inlined_call_operand.vmem [shape: f32[1,128], index: 2, kind: input, shape index: {}]
  %s3 = inlined_call_operand.hbm [shape: f32[2,128,128], index: 3, kind: input, shape index: {}]
  %s4 = inlined_call_operand.vmem [shape: f32[2,1,128], index: 4, kind: input, shape index: {}]
  %s5 = inlined_call_operand.hbm [shape: f32[128,128], index: 5, kind: input, shape index: {}]
  %s6 = inlined_call_operand.vmem [shape: f32[1,128], index: 6, kind: input, shape index: {}]
  %s7 = inlined_call_operand.hbm [shape: f32[128,128], index: 7, kind: output, shape index: {}]
  %s8 = sld [smem:[#allocation0]]
  $region54: #{tpu_custom_call.1} parent=0
    _
  %s10 = ssub.s32 1, %s8
  %s11 = scalar_select 0, %s10, %s8
  $region1: #{tpu_custom_call.1} parent=0
    #allocation2 [shape = 'u8[65536]{0}', space=vmem, size = 0x10000, scoped, tag = 'input window, operand 0, single buffered']
    #allocation3 [shape = 's32[1]{0}', space=sflag, size = 0x4, scoped, tag = 'scoped memory for tpu_custom_call.1']
    #allocation4 [shape = 's32[1]{0}', space=sflag, size = 0x4, scoped, tag = 'scoped memory for tpu_custom_call.1']
    #allocation5 [shape = 'u8[65536]{0}', space=vmem, size = 0x10000, scoped, tag = 'input window, operand 1, single buffered']
    #allocation6 [shape = 's32[1]{0}', space=sflag, size = 0x4, scoped, tag = 'scoped memory for tpu_custom_call.1']
    #allocation7 [shape = 'u8[131072]{0}', space=vmem, size = 0x20000, scoped, tag = 'input window, operand 3, single buffered']
    #allocation8 [shape = 'u8[65536]{0}', space=vmem, size = 0x10000, scoped, tag = 'input window, operand 5, single buffered']
    #allocation9 [shape = 's32[1]{0}', space=sflag, size = 0x4, scoped, tag = 'scoped memory for tpu_custom_call.1']
    #allocation10 [shape = 'u8[65536]{0}', space=vmem, size = 0x10000, scoped, tag = 'output window, operand 0, single buffered']
    %12 = vsyncpa [#allocation3], 0
    %13 = vsyncpa [#allocation6], 0
    %14 = vsyncpa [#allocation9], 0
    %15 = vsyncpa [#allocation4], 0
    // Predicated region
    $region2: #{tpu_custom_call.1} parent=1 // pred_check
      _
    $region3: #{tpu_custom_call.1} parent=1 // pred_check_branch
      %17 = sbr.rel (0) target = $region5
    $region4: #{tpu_custom_call.1} parent=1 // pred_region
      %s19 = ssub.s32 2048, 2048
      %20 = vsyncadd [#allocation3], %s19
      %s21 = sshll.u32 [#allocation2], 4
      %s22 = int_to_ptr.vmem [resolvable:$true] %s21
      %27 = dma.hbm_to_vmem [thread:$0]  %s0, 2048, %s22, [#allocation3], 128, 128, 8
    $region5: #{tpu_custom_call.1} parent=1 // pred_fallthru
      _
    // Predicated region
    $region6: #{tpu_custom_call.1} parent=1 // pred_check
      _
    $region7: #{tpu_custom_call.1} parent=1 // pred_check_branch
      %29 = sbr.rel (0) target = $region9
    $region8: #{tpu_custom_call.1} parent=1 // pred_region
      %s31 = ssub.s32 2048, 2048
      %32 = vsyncadd [#allocation6], %s31
      %s33 = sshll.u32 [#allocation5], 4
      %s34 = int_to_ptr.vmem [resolvable:$true] %s33
      %39 = dma.hbm_to_vmem [thread:$0]  %s1, 2048, %s34, [#allocation6], 128, 128, 8
    $region9: #{tpu_custom_call.1} parent=1 // pred_fallthru
      _
    // Predicated region
    $region10: #{tpu_custom_call.1} parent=1 // pred_check
      _
    $region11: #{tpu_custom_call.1} parent=1 // pred_check_branch
      %41 = sbr.rel (0) target = $region13
    $region12: #{tpu_custom_call.1} parent=1 // pred_region
      _
    $region13: #{tpu_custom_call.1} parent=1 // pred_fallthru
      _
    // Predicated region
    $region14: #{tpu_custom_call.1} parent=1 // pred_check
      _
    $region15: #{tpu_custom_call.1} parent=1 // pred_check_branch
      %43 = sbr.rel (0) target = $region17
    $region16: #{tpu_custom_call.1} parent=1 // pred_region
      %s45 = ssub.s32 4096, 4096
      %46 = vsyncadd [#allocation6], %s45
      %s47 = sshll.u32 [#allocation7], 4
      %s48 = int_to_ptr.vmem [resolvable:$true] %s47
      %53 = dma.hbm_to_vmem [thread:$0]  %s3, 4096, %s48, [#allocation6], 128, 128, 8
    $region17: #{tpu_custom_call.1} parent=1 // pred_fallthru
      _
    // Predicated region
    $region18: #{tpu_custom_call.1} parent=1 // pred_check
      _
    $region19: #{tpu_custom_call.1} parent=1 // pred_check_branch
      %55 = sbr.rel (0) target = $region21
    $region20: #{tpu_custom_call.1} parent=1 // pred_region
      _
    $region21: #{tpu_custom_call.1} parent=1 // pred_fallthru
      _
    // Predicated region
    $region22: #{tpu_custom_call.1} parent=1 // pred_check
      _
    $region23: #{tpu_custom_call.1} parent=1 // pred_check_branch
      %57 = sbr.rel (0) target = $region25
    $region24: #{tpu_custom_call.1} parent=1 // pred_region
      %s59 = ssub.s32 2048, 2048
      %60 = vsyncadd [#allocation9], %s59
      %s61 = sshll.u32 [#allocation8], 4
      %s62 = int_to_ptr.vmem [resolvable:$true] %s61
      %67 = dma.hbm_to_vmem [thread:$0]  %s5, 2048, %s62, [#allocation9], 128, 128, 8
    $region25: #{tpu_custom_call.1} parent=1 // pred_fallthru
      _
    // Predicated region
    $region26: #{tpu_custom_call.1} parent=1 // pred_check
      _
    $region27: #{tpu_custom_call.1} parent=1 // pred_check_branch
      %69 = sbr.rel (0) target = $region29
    $region28: #{tpu_custom_call.1} parent=1 // pred_region
      _
    $region29: #{tpu_custom_call.1} parent=1 // pred_fallthru
      _
    // Predicated region
    $region30: #{tpu_custom_call.1} parent=1 // pred_check
      _
    $region31: #{tpu_custom_call.1} parent=1 // pred_check_branch
      %71 = sbr.rel (0) target = $region33
    $region32: #{tpu_custom_call.1} parent=1 // pred_region
      %72 = dma.done [#allocation3], 2048
    $region33: #{tpu_custom_call.1} parent=1 // pred_fallthru
      _
    // Predicated region
    $region34: #{tpu_custom_call.1} parent=1 // pred_check
      _
    $region35: #{tpu_custom_call.1} parent=1 // pred_check_branch
      %74 = sbr.rel (0) target = $region37
    $region36: #{tpu_custom_call.1} parent=1 // pred_region
      %75 = dma.done [#allocation6], 2048
    $region37: #{tpu_custom_call.1} parent=1 // pred_fallthru
      _
    // Predicated region
    $region38: #{tpu_custom_call.1} parent=1 // pred_check
      _
    $region39: #{tpu_custom_call.1} parent=1 // pred_check_branch
      %77 = sbr.rel (0) target = $region41
    $region40: #{tpu_custom_call.1} parent=1 // pred_region
      %78 = dma.done [#allocation6], 4096
    $region41: #{tpu_custom_call.1} parent=1 // pred_fallthru
      _
    // Predicated region
    $region42: #{tpu_custom_call.1} parent=1 // pred_check
      _
    $region43: #{tpu_custom_call.1} parent=1 // pred_check_branch
      %80 = sbr.rel (0) target = $region45
    $region44: #{tpu_custom_call.1} parent=1 // pred_region
      %81 = dma.done [#allocation9], 2048
    $region45: #{tpu_custom_call.1} parent=1 // pred_fallthru
      _
    %v82 = vld [vmem:[#allocation2] sm:$0xff]
    %v83 = vld [vmem:[#allocation2 + $0x8] sm:$0xff]
    %v84 = vld [vmem:[#allocation2 + $0x10] sm:$0xff]
    %v85 = vld [vmem:[#allocation2 + $0x18] sm:$0xff]
    %v86 = vld [vmem:[#allocation2 + $0x20] sm:$0xff]
    %v87 = vld [vmem:[#allocation2 + $0x28] sm:$0xff]
    %v88 = vld [vmem:[#allocation2 + $0x30] sm:$0xff]
    %v89 = vld [vmem:[#allocation2 + $0x38] sm:$0xff]
    %v90 = vld [vmem:[#allocation2 + $0x40] sm:$0xff]
    %v91 = vld [vmem:[#allocation2 + $0x48] sm:$0xff]
    %v92 = vld [vmem:[#allocation2 + $0x50] sm:$0xff]
    %v93 = vld [vmem:[#allocation2 + $0x58] sm:$0xff]
    %v94 = vld [vmem:[#allocation2 + $0x60] sm:$0xff]
    %v95 = vld [vmem:[#allocation2 + $0x68] sm:$0xff]
    %v96 = vld [vmem:[#allocation2 + $0x70] sm:$0xff]
    %v97 = vld [vmem:[#allocation2 + $0x78] sm:$0xff]
    %v98 = vld [vmem:[#allocation5] sm:$0xff]
    %v99 = vld [vmem:[#allocation5 + $0x8] sm:$0xff]
    %v100 = vld [vmem:[#allocation5 + $0x10] sm:$0xff]
    %v101 = vld [vmem:[#allocation5 + $0x18] sm:$0xff]
    %v102 = vld [vmem:[#allocation5 + $0x20] sm:$0xff]
    %v103 = vld [vmem:[#allocation5 + $0x28] sm:$0xff]
    %v104 = vld [vmem:[#allocation5 + $0x30] sm:$0xff]
    %v105 = vld [vmem:[#allocation5 + $0x38] sm:$0xff]
    %v106 = vld [vmem:[#allocation5 + $0x40] sm:$0xff]
    %v107 = vld [vmem:[#allocation5 + $0x48] sm:$0xff]
    %v108 = vld [vmem:[#allocation5 + $0x50] sm:$0xff]
    %v109 = vld [vmem:[#allocation5 + $0x58] sm:$0xff]
    %v110 = vld [vmem:[#allocation5 + $0x60] sm:$0xff]
    %v111 = vld [vmem:[#allocation5 + $0x68] sm:$0xff]
    %v112 = vld [vmem:[#allocation5 + $0x70] sm:$0xff]
    %v113 = vld [vmem:[#allocation5 + $0x78] sm:$0xff]
    %v114 = vld [vmem:[%s2] sm:$0x1]
    %v116 = vlaneseq
    %v117 = vshrl.u32 %v116, 7
    %v118 = vsub.s32 0, %v117
    %v119 = vrot.slane %v114, %v118
    %121 = vmatprep.subr.mxu0 0.0
    %122 = vmatpush1.msra.mxu0 %v98
    %123 = vmatprep.subr.mxu0 0.0
    %124 = vmatpush1.msra.mxu0 %v99
    %125 = vmatprep.subr.mxu0 0.0
    %126 = vmatpush1.msra.mxu0 %v100
    %127 = vmatprep.subr.mxu0 0.0
    %128 = vmatpush1.msra.mxu0 %v101
    %129 = vmatprep.subr.mxu0 0.0
    %130 = vmatpush1.msra.mxu0 %v102
    %131 = vmatprep.subr.mxu0 0.0
    %132 = vmatpush1.msra.mxu0 %v103
    %133 = vmatprep.subr.mxu0 0.0
    %134 = vmatpush1.msra.mxu0 %v104
    %135 = vmatprep.subr.mxu0 0.0
    %136 = vmatpush1.msra.mxu0 %v105
    %137 = vmatprep.subr.mxu0 0.0
    %138 = vmatpush1.msra.mxu0 %v106
    %139 = vmatprep.subr.mxu0 0.0
    %140 = vmatpush1.msra.mxu0 %v107
    %141 = vmatprep.subr.mxu0 0.0
    %142 = vmatpush1.msra.mxu0 %v108
    %143 = vmatprep.subr.mxu0 0.0
    %144 = vmatpush1.msra.mxu0 %v109
    %145 = vmatprep.subr.mxu0 0.0
    %146 = vmatpush1.msra.mxu0 %v110
    %147 = vmatprep.subr.mxu0 0.0
    %148 = vmatpush1.msra.mxu0 %v111
    %149 = vmatprep.subr.mxu0 0.0
    %150 = vmatpush1.msra.mxu0 %v112
    %151 = vmatprep.subr.mxu0 0.0
    %152 = vmatpush1.msra.mxu0 %v113
    %153 = vmatprep.subr.mxu0 0.0
    %154 = vmatpush1.msra.mxu0 0.0
    %155 = vmatprep.subr.mxu0 0.0
    %156 = vmatpush1.msra.mxu0 0.0
    %157 = vmatprep.subr.mxu0 0.0
    %158 = vmatpush1.msra.mxu0 0.0
    %159 = vmatprep.subr.mxu0 0.0
    %160 = vmatpush1.msra.mxu0 0.0
    %161 = vmatprep.subr.mxu0 0.0
    %162 = vmatpush1.msra.mxu0 0.0
    %163 = vmatprep.subr.mxu0 0.0
    %164 = vmatpush1.msra.mxu0 0.0
    %165 = vmatprep.subr.mxu0 0.0
    %166 = vmatpush1.msra.mxu0 0.0
    %167 = vmatprep.subr.mxu0 0.0
    %168 = vmatpush1.msra.mxu0 0.0
    %169 = vmatprep.subr.mxu0 0.0
    %170 = vmatpush1.msra.mxu0 0.0
    %171 = vmatprep.subr.mxu0 0.0
    %172 = vmatpush1.msra.mxu0 0.0
    %173 = vmatprep.subr.mxu0 0.0
    %174 = vmatpush1.msra.mxu0 0.0
    %175 = vmatprep.subr.mxu0 0.0
    %176 = vmatpush1.msra.mxu0 0.0
    %177 = vmatprep.subr.mxu0 0.0
    %178 = vmatpush1.msra.mxu0 0.0
    %179 = vmatprep.subr.mxu0 0.0
    %180 = vmatpush1.msra.mxu0 0.0
    %181 = vmatprep.subr.mxu0 0.0
    %182 = vmatpush1.msra.mxu0 0.0
    %183 = vmatprep.subr.mxu0 0.0
    %184 = vmatpush1.msra.mxu0 0.0
    %185 = vmatprep.mubr.f32.mxu0 0.0
    %186 = vmatmul.mubr.f32.gmra.mrb[0].mxu0 %v82
    %v187 = vpop.f32.mrb[0].mxu0
    %v188 = vadd.f32 %v119, %v187
    %v189 = vpop.f32.mrb[0].mxu0
    %190 = vmatprep.mubr.f32.mxu0 0.0
    %191 = vmatmul.mubr.f32.gmra.mrb[0].mxu0 %v83
    %v192 = vpop.f32.mrb[0].mxu0
    %v193 = vadd.f32 %v119, %v192
    %v194 = vpop.f32.mrb[0].mxu0
    %195 = vmatprep.mubr.f32.mxu0 0.0
    %196 = vmatmul.mubr.f32.gmra.mrb[0].mxu0 %v84
    %v197 = vpop.f32.mrb[0].mxu0
    %v198 = vadd.f32 %v119, %v197
    %v199 = vpop.f32.mrb[0].mxu0
    %200 = vmatprep.mubr.f32.mxu0 0.0
    %201 = vmatmul.mubr.f32.gmra.mrb[0].mxu0 %v85
    %v202 = vpop.f32.mrb[0].mxu0
    %v203 = vadd.f32 %v119, %v202
    %v204 = vpop.f32.mrb[0].mxu0
    %205 = vmatprep.mubr.f32.mxu0 0.0
    %206 = vmatmul.mubr.f32.gmra.mrb[0].mxu0 %v86
    %v207 = vpop.f32.mrb[0].mxu0
    %v208 = vadd.f32 %v119, %v207
    %v209 = vpop.f32.mrb[0].mxu0
    %210 = vmatprep.mubr.f32.mxu0 0.0
    %211 = vmatmul.mubr.f32.gmra.mrb[0].mxu0 %v87
    %v212 = vpop.f32.mrb[0].mxu0
    %v213 = vadd.f32 %v119, %v212
    %v214 = vpop.f32.mrb[0].mxu0
    %215 = vmatprep.mubr.f32.mxu0 0.0
    %216 = vmatmul.mubr.f32.gmra.mrb[0].mxu0 %v88
    %v217 = vpop.f32.mrb[0].mxu0
    %v218 = vadd.f32 %v119, %v217
    %v219 = vpop.f32.mrb[0].mxu0
    %220 = vmatprep.mubr.f32.mxu0 0.0
    %221 = vmatmul.mubr.f32.gmra.mrb[0].mxu0 %v89
    %v222 = vpop.f32.mrb[0].mxu0
    %v223 = vadd.f32 %v119, %v222
    %v224 = vpop.f32.mrb[0].mxu0
    %225 = vmatprep.mubr.f32.mxu0 0.0
    %226 = vmatmul.mubr.f32.gmra.mrb[0].mxu0 %v90
    %v227 = vpop.f32.mrb[0].mxu0
    %v228 = vadd.f32 %v119, %v227
    %v229 = vpop.f32.mrb[0].mxu0
    %230 = vmatprep.mubr.f32.mxu0 0.0
    %231 = vmatmul.mubr.f32.gmra.mrb[0].mxu0 %v91
    %v232 = vpop.f32.mrb[0].mxu0
    %v233 = vadd.f32 %v119, %v232
    %v234 = vpop.f32.mrb[0].mxu0
    %235 = vmatprep.mubr.f32.mxu0 0.0
    %236 = vmatmul.mubr.f32.gmra.mrb[0].mxu0 %v92
    %v237 = vpop.f32.mrb[0].mxu0
    %v238 = vadd.f32 %v119, %v237
    %v239 = vpop.f32.mrb[0].mxu0
    %240 = vmatprep.mubr.f32.mxu0 0.0
    %241 = vmatmul.mubr.f32.gmra.mrb[0].mxu0 %v93
    %v242 = vpop.f32.mrb[0].mxu0
    %v243 = vadd.f32 %v119, %v242
    %v244 = vpop.f32.mrb[0].mxu0
    %245 = vmatprep.mubr.f32.mxu0 0.0
    %246 = vmatmul.mubr.f32.gmra.mrb[0].mxu0 %v94
    %v247 = vpop.f32.mrb[0].mxu0
    %v248 = vadd.f32 %v119, %v247
    %v249 = vpop.f32.mrb[0].mxu0
    %250 = vmatprep.mubr.f32.mxu0 0.0
    %251 = vmatmul.mubr.f32.gmra.mrb[0].mxu0 %v95
    %v252 = vpop.f32.mrb[0].mxu0
    %v253 = vadd.f32 %v119, %v252
    %v254 = vpop.f32.mrb[0].mxu0
    %255 = vmatprep.mubr.f32.mxu0 0.0
    %256 = vmatmul.mubr.f32.gmra.mrb[0].mxu0 %v96
    %v257 = vpop.f32.mrb[0].mxu0
    %v258 = vadd.f32 %v119, %v257
    %v259 = vpop.f32.mrb[0].mxu0
    %260 = vmatprep.mubr.f32.mxu0 0.0
    %261 = vmatmul.mubr.f32.gmra.mrb[0].mxu0 %v97
    %v262 = vpop.f32.mrb[0].mxu0
    %v263 = vadd.f32 %v119, %v262
    %v264 = vpop.f32.mrb[0].mxu0
    %265 = vdwg.mxu0
    %v266 = vmax.f32 %v188, 0.0
    %v267 = vmax.f32 %v193, 0.0
    %v268 = vmax.f32 %v198, 0.0
    %v269 = vmax.f32 %v203, 0.0
    %v270 = vmax.f32 %v208, 0.0
    %v271 = vmax.f32 %v213, 0.0
    %v272 = vmax.f32 %v218, 0.0
    %v273 = vmax.f32 %v223, 0.0
    %v274 = vmax.f32 %v228, 0.0
    %v275 = vmax.f32 %v233, 0.0
    %v276 = vmax.f32 %v238, 0.0
    %v277 = vmax.f32 %v243, 0.0
    %v278 = vmax.f32 %v248, 0.0
    %v279 = vmax.f32 %v253, 0.0
    %v280 = vmax.f32 %v258, 0.0
    %v281 = vmax.f32 %v263, 0.0
    %v282 = vld [vmem:[#allocation7] sm:$0xff]
    %v283 = vld [vmem:[#allocation7 + $0x8] sm:$0xff]
    %v284 = vld [vmem:[#allocation7 + $0x10] sm:$0xff]
    %v285 = vld [vmem:[#allocation7 + $0x18] sm:$0xff]
    %v286 = vld [vmem:[#allocation7 + $0x20] sm:$0xff]
    %v287 = vld [vmem:[#allocation7 + $0x28] sm:$0xff]
    %v288 = vld [vmem:[#allocation7 + $0x30] sm:$0xff]
    %v289 = vld [vmem:[#allocation7 + $0x38] sm:$0xff]
    %v290 = vld [vmem:[#allocation7 + $0x40] sm:$0xff]
    %v291 = vld [vmem:[#allocation7 + $0x48] sm:$0xff]
    %v292 = vld [vmem:[#allocation7 + $0x50] sm:$0xff]
    %v293 = vld [vmem:[#allocation7 + $0x58] sm:$0xff]
    %v294 = vld [vmem:[#allocation7 + $0x60] sm:$0xff]
    %v295 = vld [vmem:[#allocation7 + $0x68] sm:$0xff]
    %v296 = vld [vmem:[#allocation7 + $0x70] sm:$0xff]
    %v297 = vld [vmem:[#allocation7 + $0x78] sm:$0xff]
    %v298 = vld [vmem:[%s4] sm:$0x1]
    %v300 = vlaneseq
    %v301 = vshrl.u32 %v300, 7
    %v302 = vsub.s32 0, %v301
    %v303 = vrot.slane %v298, %v302
    %305 = vmatprep.subr.mxu0 0.0
    %306 = vmatpush1.msra.mxu0 %v282
    %307 = vmatprep.subr.mxu0 0.0
    %308 = vmatpush1.msra.mxu0 %v283
    %309 = vmatprep.subr.mxu0 0.0
    %310 = vmatpush1.msra.mxu0 %v284
    %311 = vmatprep.subr.mxu0 0.0
    %312 = vmatpush1.msra.mxu0 %v285
    %313 = vmatprep.subr.mxu0 0.0
    %314 = vmatpush1.msra.mxu0 %v286
    %315 = vmatprep.subr.mxu0 0.0
    %316 = vmatpush1.msra.mxu0 %v287
    %317 = vmatprep.subr.mxu0 0.0
    %318 = vmatpush1.msra.mxu0 %v288
    %319 = vmatprep.subr.mxu0 0.0
    %320 = vmatpush1.msra.mxu0 %v289
    %321 = vmatprep.subr.mxu0 0.0
    %322 = vmatpush1.msra.mxu0 %v290
    %323 = vmatprep.subr.mxu0 0.0
    %324 = vmatpush1.msra.mxu0 %v291
    %325 = vmatprep.subr.mxu0 0.0
    %326 = vmatpush1.msra.mxu0 %v292
    %327 = vmatprep.subr.mxu0 0.0
    %328 = vmatpush1.msra.mxu0 %v293
    %329 = vmatprep.subr.mxu0 0.0
    %330 = vmatpush1.msra.mxu0 %v294
    %331 = vmatprep.subr.mxu0 0.0
    %332 = vmatpush1.msra.mxu0 %v295
    %333 = vmatprep.subr.mxu0 0.0
    %334 = vmatpush1.msra.mxu0 %v296
    %335 = vmatprep.subr.mxu0 0.0
    %336 = vmatpush1.msra.mxu0 %v297
    %337 = vmatprep.subr.mxu0 0.0
    %338 = vmatpush1.msra.mxu0 0.0
    %339 = vmatprep.subr.mxu0 0.0
    %340 = vmatpush1.msra.mxu0 0.0
    %341 = vmatprep.subr.mxu0 0.0
    %342 = vmatpush1.msra.mxu0 0.0
    %343 = vmatprep.subr.mxu0 0.0
    %344 = vmatpush1.msra.mxu0 0.0
    %345 = vmatprep.subr.mxu0 0.0
    %346 = vmatpush1.msra.mxu0 0.0
    %347 = vmatprep.subr.mxu0 0.0
    %348 = vmatpush1.msra.mxu0 0.0
    %349 = vmatprep.subr.mxu0 0.0
    %350 = vmatpush1.msra.mxu0 0.0
    %351 = vmatprep.subr.mxu0 0.0
    %352 = vmatpush1.msra.mxu0 0.0
    %353 = vmatprep.subr.mxu0 0.0
    %354 = vmatpush1.msra.mxu0 0.0
    %355 = vmatprep.subr.mxu0 0.0
    %356 = vmatpush1.msra.mxu0 0.0
    %357 = vmatprep.subr.mxu0 0.0
    %358 = vmatpush1.msra.mxu0 0.0
    %359 = vmatprep.subr.mxu0 0.0
    %360 = vmatpush1.msra.mxu0 0.0
    %361 = vmatprep.subr.mxu0 0.0
    %362 = vmatpush1.msra.mxu0 0.0
    %363 = vmatprep.subr.mxu0 0.0
    %364 = vmatpush1.msra.mxu0 0.0
    %365 = vmatprep.subr.mxu0 0.0
    %366 = vmatpush1.msra.mxu0 0.0
    %367 = vmatprep.subr.mxu0 0.0
    %368 = vmatpush1.msra.mxu0 0.0
    %369 = vmatprep.mubr.f32.mxu0 0.0
    %370 = vmatmul.mubr.f32.gmra.mrb[0].mxu0 %v266
    %v371 = vpop.f32.mrb[0].mxu0
    %v372 = vadd.f32 %v303, %v371
    %v373 = vpop.f32.mrb[0].mxu0
    %374 = vmatprep.mubr.f32.mxu0 0.0
    %375 = vmatmul.mubr.f32.gmra.mrb[0].mxu0 %v267
    %v376 = vpop.f32.mrb[0].mxu0
    %v377 = vadd.f32 %v303, %v376
    %v378 = vpop.f32.mrb[0].mxu0
    %379 = vmatprep.mubr.f32.mxu0 0.0
    %380 = vmatmul.mubr.f32.gmra.mrb[0].mxu0 %v268
    %v381 = vpop.f32.mrb[0].mxu0
    %v382 = vadd.f32 %v303, %v381
    %v383 = vpop.f32.mrb[0].mxu0
    %384 = vmatprep.mubr.f32.mxu0 0.0
    %385 = vmatmul.mubr.f32.gmra.mrb[0].mxu0 %v269
    %v386 = vpop.f32.mrb[0].mxu0
    %v387 = vadd.f32 %v303, %v386
    %v388 = vpop.f32.mrb[0].mxu0
    %389 = vmatprep.mubr.f32.mxu0 0.0
    %390 = vmatmul.mubr.f32.gmra.mrb[0].mxu0 %v270
    %v391 = vpop.f32.mrb[0].mxu0
    %v392 = vadd.f32 %v303, %v391
    %v393 = vpop.f32.mrb[0].mxu0
    %394 = vmatprep.mubr.f32.mxu0 0.0
    %395 = vmatmul.mubr.f32.gmra.mrb[0].mxu0 %v271
    %v396 = vpop.f32.mrb[0].mxu0
    %v397 = vadd.f32 %v303, %v396
    %v398 = vpop.f32.mrb[0].mxu0
    %399 = vmatprep.mubr.f32.mxu0 0.0
    %400 = vmatmul.mubr.f32.gmra.mrb[0].mxu0 %v272
    %v401 = vpop.f32.mrb[0].mxu0
    %v402 = vadd.f32 %v303, %v401
    %v403 = vpop.f32.mrb[0].mxu0
    %404 = vmatprep.mubr.f32.mxu0 0.0
    %405 = vmatmul.mubr.f32.gmra.mrb[0].mxu0 %v273
    %v406 = vpop.f32.mrb[0].mxu0
    %v407 = vadd.f32 %v303, %v406
    %v408 = vpop.f32.mrb[0].mxu0
    %409 = vmatprep.mubr.f32.mxu0 0.0
    %410 = vmatmul.mubr.f32.gmra.mrb[0].mxu0 %v274
    %v411 = vpop.f32.mrb[0].mxu0
    %v412 = vadd.f32 %v303, %v411
    %v413 = vpop.f32.mrb[0].mxu0
    %414 = vmatprep.mubr.f32.mxu0 0.0
    %415 = vmatmul.mubr.f32.gmra.mrb[0].mxu0 %v275
    %v416 = vpop.f32.mrb[0].mxu0
    %v417 = vadd.f32 %v303, %v416
    %v418 = vpop.f32.mrb[0].mxu0
    %419 = vmatprep.mubr.f32.mxu0 0.0
    %420 = vmatmul.mubr.f32.gmra.mrb[0].mxu0 %v276
    %v421 = vpop.f32.mrb[0].mxu0
    %v422 = vadd.f32 %v303, %v421
    %v423 = vpop.f32.mrb[0].mxu0
    %424 = vmatprep.mubr.f32.mxu0 0.0
    %425 = vmatmul.mubr.f32.gmra.mrb[0].mxu0 %v277
    %v426 = vpop.f32.mrb[0].mxu0
    %v427 = vadd.f32 %v303, %v426
    %v428 = vpop.f32.mrb[0].mxu0
    %429 = vmatprep.mubr.f32.mxu0 0.0
    %430 = vmatmul.mubr.f32.gmra.mrb[0].mxu0 %v278
    %v431 = vpop.f32.mrb[0].mxu0
    %v432 = vadd.f32 %v303, %v431
    %v433 = vpop.f32.mrb[0].mxu0
    %434 = vmatprep.mubr.f32.mxu0 0.0
    %435 = vmatmul.mubr.f32.gmra.mrb[0].mxu0 %v279
    %v436 = vpop.f32.mrb[0].mxu0
    %v437 = vadd.f32 %v303, %v436
    %v438 = vpop.f32.mrb[0].mxu0
    %439 = vmatprep.mubr.f32.mxu0 0.0
    %440 = vmatmul.mubr.f32.gmra.mrb[0].mxu0 %v280
    %v441 = vpop.f32.mrb[0].mxu0
    %v442 = vadd.f32 %v303, %v441
    %v443 = vpop.f32.mrb[0].mxu0
    %444 = vmatprep.mubr.f32.mxu0 0.0
    %445 = vmatmul.mubr.f32.gmra.mrb[0].mxu0 %v281
    %v446 = vpop.f32.mrb[0].mxu0
    %v447 = vadd.f32 %v303, %v446
    %v448 = vpop.f32.mrb[0].mxu0
    %449 = vdwg.mxu0
    %v450 = vadd.f32 %v372, %v266
    %v451 = vadd.f32 %v377, %v267
    %v452 = vadd.f32 %v382, %v268
    %v453 = vadd.f32 %v387, %v269
    %v454 = vadd.f32 %v392, %v270
    %v455 = vadd.f32 %v397, %v271
    %v456 = vadd.f32 %v402, %v272
    %v457 = vadd.f32 %v407, %v273
    %v458 = vadd.f32 %v412, %v274
    %v459 = vadd.f32 %v417, %v275
    %v460 = vadd.f32 %v422, %v276
    %v461 = vadd.f32 %v427, %v277
    %v462 = vadd.f32 %v432, %v278
    %v463 = vadd.f32 %v437, %v279
    %v464 = vadd.f32 %v442, %v280
    %v465 = vadd.f32 %v447, %v281
    %v466 = vmax.f32 %v450, 0.0
    %v467 = vmax.f32 %v451, 0.0
    %v468 = vmax.f32 %v452, 0.0
    %v469 = vmax.f32 %v453, 0.0
    %v470 = vmax.f32 %v454, 0.0
    %v471 = vmax.f32 %v455, 0.0
    %v472 = vmax.f32 %v456, 0.0
    %v473 = vmax.f32 %v457, 0.0
    %v474 = vmax.f32 %v458, 0.0
    %v475 = vmax.f32 %v459, 0.0
    %v476 = vmax.f32 %v460, 0.0
    %v477 = vmax.f32 %v461, 0.0
    %v478 = vmax.f32 %v462, 0.0
    %v479 = vmax.f32 %v463, 0.0
    %v480 = vmax.f32 %v464, 0.0
    %v481 = vmax.f32 %v465, 0.0
    %s482 = scalar_lea.vmem [#allocation7], 128
    %v483 = vld [vmem:[%s482] sm:$0xff]
    %v484 = vld [vmem:[%s482 + $0x8] sm:$0xff]
    %v485 = vld [vmem:[%s482 + $0x10] sm:$0xff]
    %v486 = vld [vmem:[%s482 + $0x18] sm:$0xff]
    %v487 = vld [vmem:[%s482 + $0x20] sm:$0xff]
    %v488 = vld [vmem:[%s482 + $0x28] sm:$0xff]
    %v489 = vld [vmem:[%s482 + $0x30] sm:$0xff]
    %v490 = vld [vmem:[%s482 + $0x38] sm:$0xff]
    %v491 = vld [vmem:[%s482 + $0x40] sm:$0xff]
    %v492 = vld [vmem:[%s482 + $0x48] sm:$0xff]
    %v493 = vld [vmem:[%s482 + $0x50] sm:$0xff]
    %v494 = vld [vmem:[%s482 + $0x58] sm:$0xff]
    %v495 = vld [vmem:[%s482 + $0x60] sm:$0xff]
    %v496 = vld [vmem:[%s482 + $0x68] sm:$0xff]
    %v497 = vld [vmem:[%s482 + $0x70] sm:$0xff]
    %v498 = vld [vmem:[%s482 + $0x78] sm:$0xff]
    %s499 = scalar_lea.vmem %s4, 1
    %v500 = vld [vmem:[%s499] sm:$0x1]
    %v502 = vlaneseq
    %v503 = vshrl.u32 %v502, 7
    %v504 = vsub.s32 0, %v503
    %v505 = vrot.slane %v500, %v504
    %507 = vmatprep.subr.mxu0 0.0
    %508 = vmatpush1.msra.mxu0 %v483
    %509 = vmatprep.subr.mxu0 0.0
    %510 = vmatpush1.msra.mxu0 %v484
    %511 = vmatprep.subr.mxu0 0.0
    %512 = vmatpush1.msra.mxu0 %v485
    %513 = vmatprep.subr.mxu0 0.0
    %514 = vmatpush1.msra.mxu0 %v486
    %515 = vmatprep.subr.mxu0 0.0
    %516 = vmatpush1.msra.mxu0 %v487
    %517 = vmatprep.subr.mxu0 0.0
    %518 = vmatpush1.msra.mxu0 %v488
    %519 = vmatprep.subr.mxu0 0.0
    %520 = vmatpush1.msra.mxu0 %v489
    %521 = vmatprep.subr.mxu0 0.0
    %522 = vmatpush1.msra.mxu0 %v490
    %523 = vmatprep.subr.mxu0 0.0
    %524 = vmatpush1.msra.mxu0 %v491
    %525 = vmatprep.subr.mxu0 0.0
    %526 = vmatpush1.msra.mxu0 %v492
    %527 = vmatprep.subr.mxu0 0.0
    %528 = vmatpush1.msra.mxu0 %v493
    %529 = vmatprep.subr.mxu0 0.0
    %530 = vmatpush1.msra.mxu0 %v494
    %531 = vmatprep.subr.mxu0 0.0
    %532 = vmatpush1.msra.mxu0 %v495
    %533 = vmatprep.subr.mxu0 0.0
    %534 = vmatpush1.msra.mxu0 %v496
    %535 = vmatprep.subr.mxu0 0.0
    %536 = vmatpush1.msra.mxu0 %v497
    %537 = vmatprep.subr.mxu0 0.0
    %538 = vmatpush1.msra.mxu0 %v498
    %539 = vmatprep.subr.mxu0 0.0
    %540 = vmatpush1.msra.mxu0 0.0
    %541 = vmatprep.subr.mxu0 0.0
    %542 = vmatpush1.msra.mxu0 0.0
    %543 = vmatprep.subr.mxu0 0.0
    %544 = vmatpush1.msra.mxu0 0.0
    %545 = vmatprep.subr.mxu0 0.0
    %546 = vmatpush1.msra.mxu0 0.0
    %547 = vmatprep.subr.mxu0 0.0
    %548 = vmatpush1.msra.mxu0 0.0
    %549 = vmatprep.subr.mxu0 0.0
    %550 = vmatpush1.msra.mxu0 0.0
    %551 = vmatprep.subr.mxu0 0.0
    %552 = vmatpush1.msra.mxu0 0.0
    %553 = vmatprep.subr.mxu0 0.0
    %554 = vmatpush1.msra.mxu0 0.0
    %555 = vmatprep.subr.mxu0 0.0
    %556 = vmatpush1.msra.mxu0 0.0
    %557 = vmatprep.subr.mxu0 0.0
    %558 = vmatpush1.msra.mxu0 0.0
    %559 = vmatprep.subr.mxu0 0.0
    %560 = vmatpush1.msra.mxu0 0.0
    %561 = vmatprep.subr.mxu0 0.0
    %562 = vmatpush1.msra.mxu0 0.0
    %563 = vmatprep.subr.mxu0 0.0
    %564 = vmatpush1.msra.mxu0 0.0
    %565 = vmatprep.subr.mxu0 0.0
    %566 = vmatpush1.msra.mxu0 0.0
    %567 = vmatprep.subr.mxu0 0.0
    %568 = vmatpush1.msra.mxu0 0.0
    %569 = vmatprep.subr.mxu0 0.0
    %570 = vmatpush1.msra.mxu0 0.0
    %571 = vmatprep.mubr.f32.mxu0 0.0
    %572 = vmatmul.mubr.f32.gmra.mrb[0].mxu0 %v466
    %v573 = vpop.f32.mrb[0].mxu0
    %v574 = vadd.f32 %v505, %v573
    %v575 = vpop.f32.mrb[0].mxu0
    %576 = vmatprep.mubr.f32.mxu0 0.0
    %577 = vmatmul.mubr.f32.gmra.mrb[0].mxu0 %v467
    %v578 = vpop.f32.mrb[0].mxu0
    %v579 = vadd.f32 %v505, %v578
    %v580 = vpop.f32.mrb[0].mxu0
    %581 = vmatprep.mubr.f32.mxu0 0.0
    %582 = vmatmul.mubr.f32.gmra.mrb[0].mxu0 %v468
    %v583 = vpop.f32.mrb[0].mxu0
    %v584 = vadd.f32 %v505, %v583
    %v585 = vpop.f32.mrb[0].mxu0
    %586 = vmatprep.mubr.f32.mxu0 0.0
    %587 = vmatmul.mubr.f32.gmra.mrb[0].mxu0 %v469
    %v588 = vpop.f32.mrb[0].mxu0
    %v589 = vadd.f32 %v505, %v588
    %v590 = vpop.f32.mrb[0].mxu0
    %591 = vmatprep.mubr.f32.mxu0 0.0
    %592 = vmatmul.mubr.f32.gmra.mrb[0].mxu0 %v470
    %v593 = vpop.f32.mrb[0].mxu0
    %v594 = vadd.f32 %v505, %v593
    %v595 = vpop.f32.mrb[0].mxu0
    %596 = vmatprep.mubr.f32.mxu0 0.0
    %597 = vmatmul.mubr.f32.gmra.mrb[0].mxu0 %v471
    %v598 = vpop.f32.mrb[0].mxu0
    %v599 = vadd.f32 %v505, %v598
    %v600 = vpop.f32.mrb[0].mxu0
    %601 = vmatprep.mubr.f32.mxu0 0.0
    %602 = vmatmul.mubr.f32.gmra.mrb[0].mxu0 %v472
    %v603 = vpop.f32.mrb[0].mxu0
    %v604 = vadd.f32 %v505, %v603
    %v605 = vpop.f32.mrb[0].mxu0
    %606 = vmatprep.mubr.f32.mxu0 0.0
    %607 = vmatmul.mubr.f32.gmra.mrb[0].mxu0 %v473
    %v608 = vpop.f32.mrb[0].mxu0
    %v609 = vadd.f32 %v505, %v608
    %v610 = vpop.f32.mrb[0].mxu0
    %611 = vmatprep.mubr.f32.mxu0 0.0
    %612 = vmatmul.mubr.f32.gmra.mrb[0].mxu0 %v474
    %v613 = vpop.f32.mrb[0].mxu0
    %v614 = vadd.f32 %v505, %v613
    %v615 = vpop.f32.mrb[0].mxu0
    %616 = vmatprep.mubr.f32.mxu0 0.0
    %617 = vmatmul.mubr.f32.gmra.mrb[0].mxu0 %v475
    %v618 = vpop.f32.mrb[0].mxu0
    %v619 = vadd.f32 %v505, %v618
    %v620 = vpop.f32.mrb[0].mxu0
    %621 = vmatprep.mubr.f32.mxu0 0.0
    %622 = vmatmul.mubr.f32.gmra.mrb[0].mxu0 %v476
    %v623 = vpop.f32.mrb[0].mxu0
    %v624 = vadd.f32 %v505, %v623
    %v625 = vpop.f32.mrb[0].mxu0
    %626 = vmatprep.mubr.f32.mxu0 0.0
    %627 = vmatmul.mubr.f32.gmra.mrb[0].mxu0 %v477
    %v628 = vpop.f32.mrb[0].mxu0
    %v629 = vadd.f32 %v505, %v628
    %v630 = vpop.f32.mrb[0].mxu0
    %631 = vmatprep.mubr.f32.mxu0 0.0
    %632 = vmatmul.mubr.f32.gmra.mrb[0].mxu0 %v478
    %v633 = vpop.f32.mrb[0].mxu0
    %v634 = vadd.f32 %v505, %v633
    %v635 = vpop.f32.mrb[0].mxu0
    %636 = vmatprep.mubr.f32.mxu0 0.0
    %637 = vmatmul.mubr.f32.gmra.mrb[0].mxu0 %v479
    %v638 = vpop.f32.mrb[0].mxu0
    %v639 = vadd.f32 %v505, %v638
    %v640 = vpop.f32.mrb[0].mxu0
    %641 = vmatprep.mubr.f32.mxu0 0.0
    %642 = vmatmul.mubr.f32.gmra.mrb[0].mxu0 %v480
    %v643 = vpop.f32.mrb[0].mxu0
    %v644 = vadd.f32 %v505, %v643
    %v645 = vpop.f32.mrb[0].mxu0
    %646 = vmatprep.mubr.f32.mxu0 0.0
    %647 = vmatmul.mubr.f32.gmra.mrb[0].mxu0 %v481
    %v648 = vpop.f32.mrb[0].mxu0
    %v649 = vadd.f32 %v505, %v648
    %v650 = vpop.f32.mrb[0].mxu0
    %651 = vdwg.mxu0
    %v652 = vadd.f32 %v574, %v466
    %v653 = vadd.f32 %v579, %v467
    %v654 = vadd.f32 %v584, %v468
    %v655 = vadd.f32 %v589, %v469
    %v656 = vadd.f32 %v594, %v470
    %v657 = vadd.f32 %v599, %v471
    %v658 = vadd.f32 %v604, %v472
    %v659 = vadd.f32 %v609, %v473
    %v660 = vadd.f32 %v614, %v474
    %v661 = vadd.f32 %v619, %v475
    %v662 = vadd.f32 %v624, %v476
    %v663 = vadd.f32 %v629, %v477
    %v664 = vadd.f32 %v634, %v478
    %v665 = vadd.f32 %v639, %v479
    %v666 = vadd.f32 %v644, %v480
    %v667 = vadd.f32 %v649, %v481
    %v668 = vmax.f32 %v652, 0.0
    %v669 = vmax.f32 %v653, 0.0
    %v670 = vmax.f32 %v654, 0.0
    %v671 = vmax.f32 %v655, 0.0
    %v672 = vmax.f32 %v656, 0.0
    %v673 = vmax.f32 %v657, 0.0
    %v674 = vmax.f32 %v658, 0.0
    %v675 = vmax.f32 %v659, 0.0
    %v676 = vmax.f32 %v660, 0.0
    %v677 = vmax.f32 %v661, 0.0
    %v678 = vmax.f32 %v662, 0.0
    %v679 = vmax.f32 %v663, 0.0
    %v680 = vmax.f32 %v664, 0.0
    %v681 = vmax.f32 %v665, 0.0
    %v682 = vmax.f32 %v666, 0.0
    %v683 = vmax.f32 %v667, 0.0
    %v684 = vld [vmem:[#allocation8] sm:$0xff]
    %v685 = vld [vmem:[#allocation8 + $0x8] sm:$0xff]
    %v686 = vld [vmem:[#allocation8 + $0x10] sm:$0xff]
    %v687 = vld [vmem:[#allocation8 + $0x18] sm:$0xff]
    %v688 = vld [vmem:[#allocation8 + $0x20] sm:$0xff]
    %v689 = vld [vmem:[#allocation8 + $0x28] sm:$0xff]
    %v690 = vld [vmem:[#allocation8 + $0x30] sm:$0xff]
    %v691 = vld [vmem:[#allocation8 + $0x38] sm:$0xff]
    %v692 = vld [vmem:[#allocation8 + $0x40] sm:$0xff]
    %v693 = vld [vmem:[#allocation8 + $0x48] sm:$0xff]
    %v694 = vld [vmem:[#allocation8 + $0x50] sm:$0xff]
    %v695 = vld [vmem:[#allocation8 + $0x58] sm:$0xff]
    %v696 = vld [vmem:[#allocation8 + $0x60] sm:$0xff]
    %v697 = vld [vmem:[#allocation8 + $0x68] sm:$0xff]
    %v698 = vld [vmem:[#allocation8 + $0x70] sm:$0xff]
    %v699 = vld [vmem:[#allocation8 + $0x78] sm:$0xff]
    %v700 = vld [vmem:[%s6] sm:$0x1]
    %v702 = vlaneseq
    %v703 = vshrl.u32 %v702, 7
    %v704 = vsub.s32 0, %v703
    %v705 = vrot.slane %v700, %v704
    %707 = vmatprep.subr.mxu0 0.0
    %708 = vmatpush1.msra.mxu0 %v684
    %709 = vmatprep.subr.mxu0 0.0
    %710 = vmatpush1.msra.mxu0 %v685
    %711 = vmatprep.subr.mxu0 0.0
    %712 = vmatpush1.msra.mxu0 %v686
    %713 = vmatprep.subr.mxu0 0.0
    %714 = vmatpush1.msra.mxu0 %v687
    %715 = vmatprep.subr.mxu0 0.0
    %716 = vmatpush1.msra.mxu0 %v688
    %717 = vmatprep.subr.mxu0 0.0
    %718 = vmatpush1.msra.mxu0 %v689
    %719 = vmatprep.subr.mxu0 0.0
    %720 = vmatpush1.msra.mxu0 %v690
    %721 = vmatprep.subr.mxu0 0.0
    %722 = vmatpush1.msra.mxu0 %v691
    %723 = vmatprep.subr.mxu0 0.0
    %724 = vmatpush1.msra.mxu0 %v692
    %725 = vmatprep.subr.mxu0 0.0
    %726 = vmatpush1.msra.mxu0 %v693
    %727 = vmatprep.subr.mxu0 0.0
    %728 = vmatpush1.msra.mxu0 %v694
    %729 = vmatprep.subr.mxu0 0.0
    %730 = vmatpush1.msra.mxu0 %v695
    %731 = vmatprep.subr.mxu0 0.0
    %732 = vmatpush1.msra.mxu0 %v696
    %733 = vmatprep.subr.mxu0 0.0
    %734 = vmatpush1.msra.mxu0 %v697
    %735 = vmatprep.subr.mxu0 0.0
    %736 = vmatpush1.msra.mxu0 %v698
    %737 = vmatprep.subr.mxu0 0.0
    %738 = vmatpush1.msra.mxu0 %v699
    %739 = vmatprep.subr.mxu0 0.0
    %740 = vmatpush1.msra.mxu0 0.0
    %741 = vmatprep.subr.mxu0 0.0
    %742 = vmatpush1.msra.mxu0 0.0
    %743 = vmatprep.subr.mxu0 0.0
    %744 = vmatpush1.msra.mxu0 0.0
    %745 = vmatprep.subr.mxu0 0.0
    %746 = vmatpush1.msra.mxu0 0.0
    %747 = vmatprep.subr.mxu0 0.0
    %748 = vmatpush1.msra.mxu0 0.0
    %749 = vmatprep.subr.mxu0 0.0
    %750 = vmatpush1.msra.mxu0 0.0
    %751 = vmatprep.subr.mxu0 0.0
    %752 = vmatpush1.msra.mxu0 0.0
    %753 = vmatprep.subr.mxu0 0.0
    %754 = vmatpush1.msra.mxu0 0.0
    %755 = vmatprep.subr.mxu0 0.0
    %756 = vmatpush1.msra.mxu0 0.0
    %757 = vmatprep.subr.mxu0 0.0
    %758 = vmatpush1.msra.mxu0 0.0
    %759 = vmatprep.subr.mxu0 0.0
    %760 = vmatpush1.msra.mxu0 0.0
    %761 = vmatprep.subr.mxu0 0.0
    %762 = vmatpush1.msra.mxu0 0.0
    %763 = vmatprep.subr.mxu0 0.0
    %764 = vmatpush1.msra.mxu0 0.0
    %765 = vmatprep.subr.mxu0 0.0
    %766 = vmatpush1.msra.mxu0 0.0
    %767 = vmatprep.subr.mxu0 0.0
    %768 = vmatpush1.msra.mxu0 0.0
    %769 = vmatprep.subr.mxu0 0.0
    %770 = vmatpush1.msra.mxu0 0.0
    %771 = vmatprep.mubr.f32.mxu0 0.0
    %772 = vmatmul.mubr.f32.gmra.mrb[0].mxu0 %v668
    %v773 = vpop.f32.mrb[0].mxu0
    %v774 = vadd.f32 %v705, %v773
    %v775 = vpop.f32.mrb[0].mxu0
    %776 = vmatprep.mubr.f32.mxu0 0.0
    %777 = vmatmul.mubr.f32.gmra.mrb[0].mxu0 %v669
    %v778 = vpop.f32.mrb[0].mxu0
    %v779 = vadd.f32 %v705, %v778
    %v780 = vpop.f32.mrb[0].mxu0
    %781 = vmatprep.mubr.f32.mxu0 0.0
    %782 = vmatmul.mubr.f32.gmra.mrb[0].mxu0 %v670
    %v783 = vpop.f32.mrb[0].mxu0
    %v784 = vadd.f32 %v705, %v783
    %v785 = vpop.f32.mrb[0].mxu0
    %786 = vmatprep.mubr.f32.mxu0 0.0
    %787 = vmatmul.mubr.f32.gmra.mrb[0].mxu0 %v671
    %v788 = vpop.f32.mrb[0].mxu0
    %v789 = vadd.f32 %v705, %v788
    %v790 = vpop.f32.mrb[0].mxu0
    %791 = vmatprep.mubr.f32.mxu0 0.0
    %792 = vmatmul.mubr.f32.gmra.mrb[0].mxu0 %v672
    %v793 = vpop.f32.mrb[0].mxu0
    %v794 = vadd.f32 %v705, %v793
    %v795 = vpop.f32.mrb[0].mxu0
    %796 = vmatprep.mubr.f32.mxu0 0.0
    %797 = vmatmul.mubr.f32.gmra.mrb[0].mxu0 %v673
    %v798 = vpop.f32.mrb[0].mxu0
    %v799 = vadd.f32 %v705, %v798
    %v800 = vpop.f32.mrb[0].mxu0
    %801 = vmatprep.mubr.f32.mxu0 0.0
    %802 = vmatmul.mubr.f32.gmra.mrb[0].mxu0 %v674
    %v803 = vpop.f32.mrb[0].mxu0
    %v804 = vadd.f32 %v705, %v803
    %v805 = vpop.f32.mrb[0].mxu0
    %806 = vmatprep.mubr.f32.mxu0 0.0
    %807 = vmatmul.mubr.f32.gmra.mrb[0].mxu0 %v675
    %v808 = vpop.f32.mrb[0].mxu0
    %v809 = vadd.f32 %v705, %v808
    %v810 = vpop.f32.mrb[0].mxu0
    %811 = vmatprep.mubr.f32.mxu0 0.0
    %812 = vmatmul.mubr.f32.gmra.mrb[0].mxu0 %v676
    %v813 = vpop.f32.mrb[0].mxu0
    %v814 = vadd.f32 %v705, %v813
    %v815 = vpop.f32.mrb[0].mxu0
    %816 = vmatprep.mubr.f32.mxu0 0.0
    %817 = vmatmul.mubr.f32.gmra.mrb[0].mxu0 %v677
    %v818 = vpop.f32.mrb[0].mxu0
    %v819 = vadd.f32 %v705, %v818
    %v820 = vpop.f32.mrb[0].mxu0
    %821 = vmatprep.mubr.f32.mxu0 0.0
    %822 = vmatmul.mubr.f32.gmra.mrb[0].mxu0 %v678
    %v823 = vpop.f32.mrb[0].mxu0
    %v824 = vadd.f32 %v705, %v823
    %v825 = vpop.f32.mrb[0].mxu0
    %826 = vmatprep.mubr.f32.mxu0 0.0
    %827 = vmatmul.mubr.f32.gmra.mrb[0].mxu0 %v679
    %v828 = vpop.f32.mrb[0].mxu0
    %v829 = vadd.f32 %v705, %v828
    %v830 = vpop.f32.mrb[0].mxu0
    %831 = vmatprep.mubr.f32.mxu0 0.0
    %832 = vmatmul.mubr.f32.gmra.mrb[0].mxu0 %v680
    %v833 = vpop.f32.mrb[0].mxu0
    %v834 = vadd.f32 %v705, %v833
    %v835 = vpop.f32.mrb[0].mxu0
    %836 = vmatprep.mubr.f32.mxu0 0.0
    %837 = vmatmul.mubr.f32.gmra.mrb[0].mxu0 %v681
    %v838 = vpop.f32.mrb[0].mxu0
    %v839 = vadd.f32 %v705, %v838
    %v840 = vpop.f32.mrb[0].mxu0
    %841 = vmatprep.mubr.f32.mxu0 0.0
    %842 = vmatmul.mubr.f32.gmra.mrb[0].mxu0 %v682
    %v843 = vpop.f32.mrb[0].mxu0
    %v844 = vadd.f32 %v705, %v843
    %v845 = vpop.f32.mrb[0].mxu0
    %846 = vmatprep.mubr.f32.mxu0 0.0
    %847 = vmatmul.mubr.f32.gmra.mrb[0].mxu0 %v683
    %v848 = vpop.f32.mrb[0].mxu0
    %v849 = vadd.f32 %v705, %v848
    %v850 = vpop.f32.mrb[0].mxu0
    %851 = vdwg.mxu0
    %v852 = vadd.f32 %v774, %v668
    %v853 = vadd.f32 %v779, %v669
    %v854 = vadd.f32 %v784, %v670
    %v855 = vadd.f32 %v789, %v671
    %v856 = vadd.f32 %v794, %v672
    %v857 = vadd.f32 %v799, %v673
    %v858 = vadd.f32 %v804, %v674
    %v859 = vadd.f32 %v809, %v675
    %v860 = vadd.f32 %v814, %v676
    %v861 = vadd.f32 %v819, %v677
    %v862 = vadd.f32 %v824, %v678
    %v863 = vadd.f32 %v829, %v679
    %v864 = vadd.f32 %v834, %v680
    %v865 = vadd.f32 %v839, %v681
    %v866 = vadd.f32 %v844, %v682
    %v867 = vadd.f32 %v849, %v683
    %868 = vst [vmem:[#allocation10] sm:$0xff] %v852
    %869 = vst [vmem:[#allocation10 + $0x8] sm:$0xff] %v853
    %870 = vst [vmem:[#allocation10 + $0x10] sm:$0xff] %v854
    %871 = vst [vmem:[#allocation10 + $0x18] sm:$0xff] %v855
    %872 = vst [vmem:[#allocation10 + $0x20] sm:$0xff] %v856
    %873 = vst [vmem:[#allocation10 + $0x28] sm:$0xff] %v857
    %874 = vst [vmem:[#allocation10 + $0x30] sm:$0xff] %v858
    %875 = vst [vmem:[#allocation10 + $0x38] sm:$0xff] %v859
    %876 = vst [vmem:[#allocation10 + $0x40] sm:$0xff] %v860
    %877 = vst [vmem:[#allocation10 + $0x48] sm:$0xff] %v861
    %878 = vst [vmem:[#allocation10 + $0x50] sm:$0xff] %v862
    %879 = vst [vmem:[#allocation10 + $0x58] sm:$0xff] %v863
    %880 = vst [vmem:[#allocation10 + $0x60] sm:$0xff] %v864
    %881 = vst [vmem:[#allocation10 + $0x68] sm:$0xff] %v865
    %882 = vst [vmem:[#allocation10 + $0x70] sm:$0xff] %v866
    %883 = vst [vmem:[#allocation10 + $0x78] sm:$0xff] %v867
    // Predicated region
    $region46: #{tpu_custom_call.1} parent=1 // pred_check
      _
    $region47: #{tpu_custom_call.1} parent=1 // pred_check_branch
      %885 = sbr.rel (0) target = $region49
    $region48: #{tpu_custom_call.1} parent=1 // pred_region
      %s887 = ssub.s32 2048, 2048
      %888 = vsyncadd [#allocation4], %s887
      %s889 = sshll.u32 [#allocation10], 4
      %s890 = int_to_ptr.vmem [resolvable:$true] %s889
      %895 = dma.vmem_to_hbm [thread:$0]  %s890, 2048, %s7, [#allocation4], 128, 128, 8
    $region49: #{tpu_custom_call.1} parent=1 // pred_fallthru
      _
    // Predicated region
    $region50: #{tpu_custom_call.1} parent=1 // pred_check
      _
    $region51: #{tpu_custom_call.1} parent=1 // pred_check_branch
      %897 = sbr.rel (0) target = $region53
    $region52: #{tpu_custom_call.1} parent=1 // pred_region
      %898 = dma.done [#allocation4], 2048
    $region53: #{tpu_custom_call.1} parent=1 // pred_fallthru
      _
    %899 = vsyncpa [#allocation3], 1
    %900 = vsyncpa [#allocation6], 1
    %901 = vsyncpa [#allocation9], 1
    %902 = vsyncpa [#allocation4], 1

</llo_original>
